<compile_context>
chip_gen: v6e
topology: v6e:2x2x1
jax: 0.10.0
libtpu: 0.0.40
codegen_flags: <defaults>
</compile_context>

<pallas_src>
import functools

import jax
import jax.numpy as jnp
from jax import lax
from jax.experimental import pallas as pl
from jax.experimental.pallas import tpu as pltpu

_INT32_MIN = -2147483648
_INT32_MAX = 2147483647
_NONSIGN_MASK = 0x7FFFFFFF  # flips every bit except the sign bit


def fore_back_kernel(w_ref, x_ref, out_ref, *, n_batch, hw, k, ct):
    # w_ref  : (1, 1) SMEM                 1x1-conv weight (scalar, no bias)
    # x_ref  : (1, ct*n_batch, hw) VMEM    ct channels; one (channel,batch) row per
    #                                      sublane row, pixels lane-dense
    # out_ref: (1, ct, 128) VMEM           per-channel delta broadcast over 128 lanes
    w = w_ref[0, 0]

    x = x_ref[0]                                   # (ct*B, HW)
    f1 = x * w                                     # 1x1 conv, 1->1, no bias
    e = -f1 * jnp.log(f1)                          # entropy map (EUP log)

    # per-row (= one batch element of one channel) total entropy
    row_tot = jnp.sum(e, axis=1, keepdims=True)    # (ct*B, 1)

    # ---- exact per-row sum of the k largest entropies, no sort ----
    # order-preserving float32 -> int32 key, then 32-step bisection for the
    # k-th largest key (the largest t with count(key >= t) >= k).
    flip = jnp.int32(_NONSIGN_MASK)
    bits = pltpu.bitcast(e, jnp.int32)
    key = jnp.where(bits < 0, bits ^ flip, bits)   # int32 order == float order

    n_rows = e.shape[0]                            # ct * n_batch (static)
    lo0 = jnp.full((n_rows, 1), _INT32_MIN, jnp.int32)   # always feasible
    hi0 = jnp.full((n_rows, 1), _INT32_MAX, jnp.int32)   # infeasible (no NaNs)

    def bisect_body(_, carry):
        lo, hi = carry
        # overflow-free floor((lo + hi) / 2)
        mid = (lo >> 1) + (hi >> 1) + (lo & hi & 1)
        cnt = jnp.sum((key >= mid).astype(jnp.int32), axis=1, keepdims=True)
        feasible = cnt >= k
        lo = jnp.where(feasible, mid, lo)
        hi = jnp.where(feasible, hi, mid)
        return lo, hi

    kth_key, _ = lax.fori_loop(0, 32, bisect_body, (lo0, hi0))   # (ct*B, 1)

    kth_bits = jnp.where(kth_key < 0, kth_key ^ flip, kth_key)
    kth_val = pltpu.bitcast(kth_bits, jnp.float32)               # exact k-th value

    gt = key > kth_key                                           # strictly above
    cnt_gt = jnp.sum(gt.astype(jnp.int32), axis=1, keepdims=True)
    sum_gt = jnp.sum(jnp.where(gt, e, 0.0), axis=1, keepdims=True)
    # ties at the k-th value contribute exactly (k - cnt_gt) copies
    row_topk = sum_gt + (jnp.float32(k) - cnt_gt.astype(jnp.float32)) * kth_val

    # tiny static epilogue over the ct channels of this block
    inv_all = 1.0 / float(n_batch * hw)
    inv_high = 1.0 / float(n_batch * k)
    for c in range(ct):
        tot_c = jnp.sum(row_tot[c * n_batch:(c + 1) * n_batch], axis=0, keepdims=True)
        topk_c = jnp.sum(row_topk[c * n_batch:(c + 1) * n_batch], axis=0, keepdims=True)
        mean_all = tot_c * inv_all
        mean_high = topk_c * inv_high
        # delta = mean_high - (mean - 0.5*mean_high)/0.5 == 2*(mean_high - mean)
        delta = 2.0 * (mean_high - mean_all)                     # (1, 1)
        out_ref[:, c:c + 1, :] = jnp.broadcast_to(delta.reshape(1, 1, 1), (1, 1, 128))


def _pick_channel_block(C, B, HW, budget_bytes=4 << 20, max_ct=32):
    """Largest divisor of C that fits the VMEM budget, keeping >=2 grid steps."""
    bytes_per_ch = B * HW * 4
    divisors = [d for d in range(1, C + 1) if C % d == 0]
    ok = [d for d in divisors if d <= max_ct and d * bytes_per_ch <= budget_bytes]
    if not ok:
        return 1
    multi_step = [d for d in ok if C // d >= 2]       # keep megacore sharding useful
    return max(multi_step) if multi_step else max(ok)


def fore_back_dis(hsi, conv_w):
    """hsi: (B, C, H, W) strictly-positive float32; conv_w: (1,1,1,1) conv weight.
    Returns (idx_top3 (3,) int32, deltas (C,) float32). The module's output is idx_top3."""
    B, C, H, W = hsi.shape
    HW = H * W
    k = int(0.5 * H * W)

    ct = _pick_channel_block(C, B, HW)
    n_blocks = C // ct

    # single HBM input: channel-block major, (channel,batch) rows on sublanes,
    # pixels lane-dense.  Row-major reshape keeps channel c, batch b at row
    # (c % ct)*B + b of block c // ct.
    x = jnp.transpose(hsi, (1, 0, 2, 3)).astype(jnp.float32).reshape(n_blocks, ct * B, HW)
    w_arr = conv_w.reshape(1, 1).astype(jnp.float32)

    kernel = functools.partial(fore_back_kernel, n_batch=B, hw=HW, k=k, ct=ct)

    block_in_bytes = ct * B * HW * 4
    vmem_limit = int(min(64 << 20, max(16 << 20, 4 * block_in_bytes + (4 << 20))))
    cost = pl.CostEstimate(
        flops=int(C * B * HW * 70),            # entropy + 32 bisection passes + finalize
        transcendentals=int(C * B * HW),       # one log per element
        bytes_accessed=int(C * B * HW * 4 + C * 128 * 4 + 4))

    out = pl.pallas_call(
        kernel,
        out_shape=jax.ShapeDtypeStruct((n_blocks, ct, 128), jnp.float32),
        grid_spec=pltpu.PrefetchScalarGridSpec(
            num_scalar_prefetch=0,
            grid=(n_blocks,),
            in_specs=[
                pl.BlockSpec(memory_space=pltpu.MemorySpace.SMEM),      # conv weight
                pl.BlockSpec((1, ct * B, HW), lambda c: (c, 0, 0)),     # channel block
            ],
            out_specs=pl.BlockSpec((1, ct, 128), lambda c: (c, 0, 0)),
        ),
        compiler_params=pltpu.CompilerParams(
            dimension_semantics=("parallel",),
            vmem_limit_bytes=vmem_limit),
        cost_estimate=cost,
    )(w_arr, x)

    deltas = out.reshape(C, 128)[:, 0]
    # TODO(synk): final descending sort over the C per-channel deltas (torch.sort +
    # [:3]) has no clean Pallas TPU equivalent; done with lax.top_k in the wrapper.
    idx = jax.lax.top_k(deltas, 3)[1]
    return idx, deltas


def ref_forward(hsi, w_scalar):
    """Pure-JAX mirror of the PyTorch forward (for validation)."""
    B, C, H, W = hsi.shape
    k = int(0.5 * H * W)
    deltas = []
    for i in range(C):
        f1 = w_scalar * hsi[:, i, :, :]                  # 1x1 conv, 1->1, no bias
        entropy = -f1 * jnp.log(f1)
        mean = entropy.mean()
        flat = entropy.reshape(B, H * W)
        vals_high = jax.lax.top_k(flat, k)[0]
        mean_high = vals_high.mean()
        low_mean = (mean - 0.5 * mean_high) / 0.5
        deltas.append(mean_high - low_mean)
    deltas = jnp.stack(deltas)
    idx = jax.lax.top_k(deltas, 3)[1]
    return idx, deltas


if __name__ == "__main__":
    key = jax.random.PRNGKey(0)
    kx, kw = jax.random.split(key)

    B, C, H, W = 2, 4, 16, 16
    # strictly-positive input and positive conv weight so log(f1) is finite
    base = jax.random.uniform(kx, (B, C, H, W), jnp.float32, 0.10, 0.90)
    chan_scale = jnp.linspace(0.35, 1.0, C).reshape(1, C, 1, 1)
    hsi = base * chan_scale
    conv_w = jax.random.uniform(kw, (1, 1, 1, 1), jnp.float32, 0.5, 0.95)

    idx, deltas = fore_back_dis(hsi, conv_w)
    idx = jax.block_until_ready(idx)
    deltas = jax.block_until_ready(deltas)

    ref_idx, ref_deltas = ref_forward(hsi, conv_w.reshape(()))
    assert jnp.allclose(deltas, ref_deltas, rtol=1e-4, atol=1e-5), (
        f"delta mismatch: {deltas} vs {ref_deltas}")
    assert bool(jnp.all(idx == ref_idx)), f"idx mismatch: {idx} vs {ref_idx}"

    print("KERNEL_OK")
</pallas_src>

<mosaic_0001>
module attributes {stable_mosaic.version = 11 : i64} {
  func.func @fore_back_kernel(%arg0: i32, %arg1: memref<1x1xf32, #tpu.memory_space<smem>>, %arg2: memref<1x4x256xf32, #tpu.memory_space<vmem>>, %arg3: memref<1x2x128xf32, #tpu.memory_space<vmem>>) attributes {dimension_semantics = [#tpu.dimension_semantics<parallel>], iteration_bounds = array<i64: 2>, scalar_prefetch = 0 : i64, scratch_operands = 0 : i64, tpu.core_type = #tpu.core_type<tc>, window_params = [{transform_indices = @transform_0, window_bounds = array<i64: 1, 1>}, {transform_indices = @transform_1, window_bounds = array<i64: 1, 4, 256>}, {transform_indices = @transform_2, window_bounds = array<i64: 1, 2, 128>}]} {
    %c0 = arith.constant 0 : index
    %c0_0 = arith.constant 0 : index
    %0 = memref.load %arg1[%c0, %c0_0] : memref<1x1xf32, #tpu.memory_space<smem>>
    %c0_1 = arith.constant 0 : index
    %c0_2 = arith.constant 0 : index
    %c0_3 = arith.constant 0 : index
    %1 = vector.load %arg2[%c0_1, %c0_2, %c0_3] : memref<1x4x256xf32, #tpu.memory_space<vmem>>, vector<1x4x256xf32>
    %2 = vector.shape_cast %1 : vector<1x4x256xf32> to vector<4x256xf32>
    %3 = vector.broadcast %0 : f32 to vector<4x256xf32>
    %4 = arith.mulf %2, %3 : vector<4x256xf32>
    %cst = arith.constant 0.000000e+00 : f32
    %5 = vector.broadcast %cst : f32 to vector<4x256xf32>
    %6 = arith.subf %5, %4 : vector<4x256xf32>
    %7 = math.log %4 : vector<4x256xf32>
    %8 = arith.mulf %6, %7 : vector<4x256xf32>
    %cst_4 = arith.constant dense<0.000000e+00> : vector<4xf32>
    %9 = vector.multi_reduction <add>, %8, %cst_4 [1] : vector<4x256xf32> to vector<4xf32>
    %10 = vector.shape_cast %9 : vector<4xf32> to vector<4x1xf32>
    %11 = tpu.bitcast %8 : vector<4x256xf32> -> vector<4x256xi32>
    %c0_i32 = arith.constant 0 : i32
    %12 = vector.broadcast %c0_i32 : i32 to vector<4x256xi32>
    %13 = arith.cmpi slt, %11, %12 : vector<4x256xi32>
    %c2147483647_i32 = arith.constant 2147483647 : i32
    %14 = vector.broadcast %c2147483647_i32 : i32 to vector<4x256xi32>
    %15 = arith.xori %11, %14 : vector<4x256xi32>
    %16 = arith.select %13, %15, %11 : vector<4x256xi1>, vector<4x256xi32>
    %c-2147483648_i32 = arith.constant -2147483648 : i32
    %17 = vector.broadcast %c-2147483648_i32 : i32 to vector<4x1xi32>
    %c2147483647_i32_5 = arith.constant 2147483647 : i32
    %18 = vector.broadcast %c2147483647_i32_5 : i32 to vector<4x1xi32>
    %c0_i32_6 = arith.constant 0 : i32
    %c32_i32 = arith.constant 32 : i32
    %19 = arith.addi %c0_i32_6, %c32_i32 : i32
    %c1_i32 = arith.constant 1 : i32
    %20:2 = scf.for %arg4 = %c0_i32_6 to %19 step %c1_i32 iter_args(%arg5 = %17, %arg6 = %18) -> (vector<4x1xi32>, vector<4x1xi32>)  : i32 {
      %c1_i32_28 = arith.constant 1 : i32
      %75 = vector.broadcast %c1_i32_28 : i32 to vector<4x1xi32>
      %76 = arith.shrsi %arg5, %75 : vector<4x1xi32>
      %c1_i32_29 = arith.constant 1 : i32
      %77 = vector.broadcast %c1_i32_29 : i32 to vector<4x1xi32>
      %78 = arith.shrsi %arg6, %77 : vector<4x1xi32>
      %79 = arith.addi %76, %78 : vector<4x1xi32>
      %80 = arith.andi %arg5, %arg6 : vector<4x1xi32>
      %c1_i32_30 = arith.constant 1 : i32
      %81 = vector.broadcast %c1_i32_30 : i32 to vector<4x1xi32>
      %82 = arith.andi %80, %81 : vector<4x1xi32>
      %83 = arith.addi %79, %82 : vector<4x1xi32>
      %84 = vector.broadcast %83 : vector<4x1xi32> to vector<4x256xi32>
      %85 = arith.cmpi sge, %16, %84 : vector<4x256xi32>
      %86 = arith.extui %85 : vector<4x256xi1> to vector<4x256xi32>
      %cst_31 = arith.constant dense<0> : vector<4xi32>
      %87 = vector.multi_reduction <add>, %86, %cst_31 [1] : vector<4x256xi32> to vector<4xi32>
      %88 = vector.shape_cast %87 : vector<4xi32> to vector<4x1xi32>
      %c128_i32 = arith.constant 128 : i32
      %89 = vector.broadcast %c128_i32 : i32 to vector<4x1xi32>
      %90 = arith.cmpi sge, %88, %89 : vector<4x1xi32>
      %91 = arith.select %90, %83, %arg5 : vector<4x1xi1>, vector<4x1xi32>
      %92 = arith.select %90, %arg6, %83 : vector<4x1xi1>, vector<4x1xi32>
      scf.yield %91, %92 : vector<4x1xi32>, vector<4x1xi32>
    }
    %c0_i32_7 = arith.constant 0 : i32
    %21 = vector.broadcast %c0_i32_7 : i32 to vector<4x1xi32>
    %22 = arith.cmpi slt, %20#0, %21 : vector<4x1xi32>
    %c2147483647_i32_8 = arith.constant 2147483647 : i32
    %23 = vector.broadcast %c2147483647_i32_8 : i32 to vector<4x1xi32>
    %24 = arith.xori %20#0, %23 : vector<4x1xi32>
    %25 = arith.select %22, %24, %20#0 : vector<4x1xi1>, vector<4x1xi32>
    %26 = tpu.bitcast %25 : vector<4x1xi32> -> vector<4x1xf32>
    %27 = vector.broadcast %20#0 : vector<4x1xi32> to vector<4x256xi32>
    %28 = arith.cmpi sgt, %16, %27 : vector<4x256xi32>
    %29 = arith.extui %28 : vector<4x256xi1> to vector<4x256xi32>
    %cst_9 = arith.constant dense<0> : vector<4xi32>
    %30 = vector.multi_reduction <add>, %29, %cst_9 [1] : vector<4x256xi32> to vector<4xi32>
    %31 = vector.shape_cast %30 : vector<4xi32> to vector<4x1xi32>
    %cst_10 = arith.constant 0.000000e+00 : f32
    %32 = vector.broadcast %cst_10 : f32 to vector<4x256xf32>
    %33 = arith.select %28, %8, %32 : vector<4x256xi1>, vector<4x256xf32>
    %cst_11 = arith.constant dense<0.000000e+00> : vector<4xf32>
    %34 = vector.multi_reduction <add>, %33, %cst_11 [1] : vector<4x256xf32> to vector<4xf32>
    %35 = vector.shape_cast %34 : vector<4xf32> to vector<4x1xf32>
    %36 = arith.sitofp %31 : vector<4x1xi32> to vector<4x1xf32>
    %cst_12 = arith.constant 1.280000e+02 : f32
    %37 = vector.broadcast %cst_12 : f32 to vector<4x1xf32>
    %38 = arith.subf %37, %36 : vector<4x1xf32>
    %39 = arith.mulf %38, %26 : vector<4x1xf32>
    %40 = arith.addf %35, %39 : vector<4x1xf32>
    %41 = vector.extract_strided_slice %10 {offsets = [0, 0], sizes = [2, 1], strides = [1, 1]} : vector<4x1xf32> to vector<2x1xf32>
    %cst_13 = arith.constant dense<0.000000e+00> : vector<1xf32>
    %42 = vector.multi_reduction <add>, %41, %cst_13 [0] : vector<2x1xf32> to vector<1xf32>
    %43 = vector.shape_cast %42 : vector<1xf32> to vector<1x1xf32>
    %44 = vector.extract_strided_slice %40 {offsets = [0, 0], sizes = [2, 1], strides = [1, 1]} : vector<4x1xf32> to vector<2x1xf32>
    %cst_14 = arith.constant dense<0.000000e+00> : vector<1xf32>
    %45 = vector.multi_reduction <add>, %44, %cst_14 [0] : vector<2x1xf32> to vector<1xf32>
    %46 = vector.shape_cast %45 : vector<1xf32> to vector<1x1xf32>
    %cst_15 = arith.constant 0.001953125 : f32
    %47 = vector.broadcast %cst_15 : f32 to vector<1x1xf32>
    %48 = arith.mulf %43, %47 : vector<1x1xf32>
    %cst_16 = arith.constant 3.906250e-03 : f32
    %49 = vector.broadcast %cst_16 : f32 to vector<1x1xf32>
    %50 = arith.mulf %46, %49 : vector<1x1xf32>
    %51 = arith.subf %50, %48 : vector<1x1xf32>
    %cst_17 = arith.constant 2.000000e+00 : f32
    %52 = vector.broadcast %cst_17 : f32 to vector<1x1xf32>
    %53 = arith.mulf %52, %51 : vector<1x1xf32>
    %54 = vector.shape_cast %53 : vector<1x1xf32> to vector<1x1x1xf32>
    %55 = vector.shape_cast %54 : vector<1x1x1xf32> to vector<1x1x1xf32>
    %56 = vector.broadcast %55 : vector<1x1x1xf32> to vector<1x1x128xf32>
    %c0_18 = arith.constant 0 : index
    %c0_19 = arith.constant 0 : index
    %c0_20 = arith.constant 0 : index
    %57 = vector.load %arg3[%c0_18, %c0_19, %c0_20] : memref<1x2x128xf32, #tpu.memory_space<vmem>>, vector<1x1x128xf32>
    tpu.vector_store %arg3[%c0_18, %c0_19, %c0_20], %56 {strides = array<i32>} : memref<1x2x128xf32, #tpu.memory_space<vmem>>, vector<1x1x128xf32>,
    %58 = vector.extract_strided_slice %10 {offsets = [2, 0], sizes = [2, 1], strides = [1, 1]} : vector<4x1xf32> to vector<2x1xf32>
    %cst_21 = arith.constant dense<0.000000e+00> : vector<1xf32>
    %59 = vector.multi_reduction <add>, %58, %cst_21 [0] : vector<2x1xf32> to vector<1xf32>
    %60 = vector.shape_cast %59 : vector<1xf32> to vector<1x1xf32>
    %61 = vector.extract_strided_slice %40 {offsets = [2, 0], sizes = [2, 1], strides = [1, 1]} : vector<4x1xf32> to vector<2x1xf32>
    %cst_22 = arith.constant dense<0.000000e+00> : vector<1xf32>
    %62 = vector.multi_reduction <add>, %61, %cst_22 [0] : vector<2x1xf32> to vector<1xf32>
    %63 = vector.shape_cast %62 : vector<1xf32> to vector<1x1xf32>
    %cst_23 = arith.constant 0.001953125 : f32
    %64 = vector.broadcast %cst_23 : f32 to vector<1x1xf32>
    %65 = arith.mulf %60, %64 : vector<1x1xf32>
    %cst_24 = arith.constant 3.906250e-03 : f32
    %66 = vector.broadcast %cst_24 : f32 to vector<1x1xf32>
    %67 = arith.mulf %63, %66 : vector<1x1xf32>
    %68 = arith.subf %67, %65 : vector<1x1xf32>
    %cst_25 = arith.constant 2.000000e+00 : f32
    %69 = vector.broadcast %cst_25 : f32 to vector<1x1xf32>
    %70 = arith.mulf %69, %68 : vector<1x1xf32>
    %71 = vector.shape_cast %70 : vector<1x1xf32> to vector<1x1x1xf32>
    %72 = vector.shape_cast %71 : vector<1x1x1xf32> to vector<1x1x1xf32>
    %73 = vector.broadcast %72 : vector<1x1x1xf32> to vector<1x1x128xf32>
    %c0_26 = arith.constant 0 : index
    %c1 = arith.constant 1 : index
    %c0_27 = arith.constant 0 : index
    %74 = vector.load %arg3[%c0_26, %c1, %c0_27] : memref<1x2x128xf32, #tpu.memory_space<vmem>>, vector<1x1x128xf32>
    tpu.vector_store %arg3[%c0_26, %c1, %c0_27], %73 {strides = array<i32>} : memref<1x2x128xf32, #tpu.memory_space<vmem>>, vector<1x1x128xf32>,
    return
  }
  func.func @transform_0(%arg0: i32) -> (i32, i32) {
    %c0_i32 = arith.constant 0 : i32
    %c0_i32_0 = arith.constant 0 : i32
    %c0_i32_1 = arith.constant 0 : i32
    return %c0_i32, %c0_i32_0 : i32, i32
  }
  func.func @transform_1(%arg0: i32) -> (i32, i32, i32) {
    %c0_i32 = arith.constant 0 : i32
    %c0_i32_0 = arith.constant 0 : i32
    %c0_i32_1 = arith.constant 0 : i32
    return %arg0, %c0_i32, %c0_i32_0 : i32, i32, i32
  }
  func.func @transform_2(%arg0: i32) -> (i32, i32, i32) {
    %c0_i32 = arith.constant 0 : i32
    %c0_i32_0 = arith.constant 0 : i32
    %c0_i32_1 = arith.constant 0 : i32
    return %arg0, %c0_i32, %c0_i32_0 : i32, i32, i32
  }
}

</mosaic_0001>

<llo_original>
// kernel: tpu_custom_call.1
$region0: #{tpu_custom_call.1}
  #allocation0 [shape = 'u32[]', space=smem, size = 0x4, offset = 0x4, fixed_abs, tag = 'smem constant byte address 0x4 - core index']
  #allocation1 [shape = 'u32[144,128]{1,0:T(1,128)}', space=vmem, size = 0x12000, scoped, tag = 'internal scratch']
  #allocation2 [shape = 'f32[1,1]{1,0:T(1,128)S(6)}', space=smem, size = 0x200, scoped, tag = 'scoped memory for tpu_custom_call.1']
  %s0 = inlined_call_operand.<no memory space> [shape: f32[1,1], index: 0, kind: input, shape index: {}]
  %s1 = inlined_call_operand.hbm [shape: f32[2,4,256], index: 1, kind: input, shape index: {}]
  %s2 = inlined_call_operand.hbm [shape: f32[2,2,128], index: 2, kind: output, shape index: {}]
  %s3 = sld [smem:[#allocation0]]
  $region52: #{tpu_custom_call.1} parent=0
    _
  %s5 = ssub.s32 1, %s3
  %s6 = scalar_select 0, %s5, %s3
  %7 = sst [smem:[#allocation2]] %s0
  $region1: #{tpu_custom_call.1} parent=0
    #allocation3 [shape = 'u8[8192]{0}', space=vmem, size = 0x2000, scoped, tag = 'input window, operand 1']
    #allocation4 [shape = 's32[2]{0}', space=sflag, size = 0x8, scoped, tag = 'scoped memory for tpu_custom_call.1']
    #allocation5 [shape = 's32[2]{0}', space=sflag, size = 0x8, scoped, tag = 'scoped memory for tpu_custom_call.1']
    #allocation6 [shape = 'u8[2048]{0}', space=vmem, size = 0x800, scoped, tag = 'output window, operand 0']
    %8 = vsyncpa [#allocation4], 0
    %s9 = scalar_lea.sflag [#allocation4], 1
    %10 = vsyncpa %s9, 0
    %11 = vsyncpa [#allocation5], 0
    %s12 = scalar_lea.sflag [#allocation5], 1
    %13 = vsyncpa %s12, 0
    loop: start=0, step=1, limit=4
    $region2: #{tpu_custom_call.1} parent=1 // loop_pre_header
      _
    $region3: #{tpu_custom_call.1} parent=1 // loop_header
      %s15 = sphi 0, %s19
      %p16 = scmp.ge.s32.totalorder %s15, 4
      %s23 = sphi 0, %s23
      %s25 = sphi 0, %s23
      %s26 = sphi 0, %s25
      %s40 = sphi 0, %s26
      %s46 = sphi 0, %s48
      %s49 = sphi 0, %s46
      %s50 = sphi 0, %s49
      %s66 = sphi 0, %s50
      %s72 = sphi 0, %s74
      %s75 = sphi 0, %s72
      %s76 = sphi 0, %s75
      %s92 = sphi 0, %s76
    $region4: #{tpu_custom_call.1} parent=1 // loop_header_branch
      %18 = sbr.rel (%p16) target = $region8
    $region5: #{tpu_custom_call.1} parent=1 // loop_body
      %s20 = ssub.s32 %s15, 1
      %s21 = ssub.s32 %s15, 2
      %s22 = sadd.s32 %s15, 1
      %s24 = sadd.s32 %s23, 1
      %p27 = scmp.eq.s32.totalorder %s15, 1
      %p28 = scmp.ne.s32.totalorder %s23, %s25
      %p29 = scmp.eq.s32.totalorder %s15, 0
      %p30 = por %p28, %p29
      %p31 = scmp.ne.s32.totalorder %s23, %s25
      %p32 = scmp.eq.s32.totalorder %s20, 1
      %p33 = por %p31, %p32
      %p34 = scmp.ne.s32.totalorder %s25, %s26
      %p35 = scmp.eq.s32.totalorder %s20, 0
      %p36 = por %p34, %p35
      %p37 = scmp.ne.s32.totalorder %s25, %s26
      %p38 = scmp.eq.s32.totalorder %s21, 1
      %p39 = por %p37, %p38
      %p41 = scmp.ne.s32.totalorder %s26, %s40
      %p42 = scmp.eq.s32.totalorder %s21, 0
      %p43 = por %p41, %p42
      %s44 = ssub.s32 %s15, %s22
      %p45 = scmp.eq.s32.totalorder %s44, 0
      %s47 = sadd.s32 %s46, 1
      %s48 = scalar_select %p45, %s46, %s47
      %p51 = pneg %p45
      %p52 = scmp.eq.s32.totalorder %s15, 1
      %p53 = por %p51, %p52
      %p54 = scmp.ne.s32.totalorder %s46, %s49
      %p55 = scmp.eq.s32.totalorder %s15, 0
      %p56 = por %p54, %p55
      %p57 = scmp.ne.s32.totalorder %s46, %s49
      %p58 = scmp.eq.s32.totalorder %s20, 1
      %p59 = por %p57, %p58
      %p60 = scmp.ne.s32.totalorder %s49, %s50
      %p61 = scmp.eq.s32.totalorder %s20, 0
      %p62 = por %p60, %p61
      %p63 = scmp.ne.s32.totalorder %s49, %s50
      %p64 = scmp.eq.s32.totalorder %s21, 1
      %p65 = por %p63, %p64
      %p67 = scmp.ne.s32.totalorder %s50, %s66
      %p68 = scmp.eq.s32.totalorder %s21, 0
      %p69 = por %p67, %p68
      %s70 = ssub.s32 %s15, %s22
      %p71 = scmp.eq.s32.totalorder %s70, 0
      %s73 = sadd.s32 %s72, 1
      %s74 = scalar_select %p71, %s72, %s73
      %p77 = pneg %p71
      %p78 = scmp.eq.s32.totalorder %s15, 1
      %p79 = por %p77, %p78
      %p80 = scmp.ne.s32.totalorder %s72, %s75
      %p81 = scmp.eq.s32.totalorder %s15, 0
      %p82 = por %p80, %p81
      %p83 = scmp.ne.s32.totalorder %s72, %s75
      %p84 = scmp.eq.s32.totalorder %s20, 1
      %p85 = por %p83, %p84
      %p86 = scmp.ne.s32.totalorder %s75, %s76
      %p87 = scmp.eq.s32.totalorder %s20, 0
      %p88 = por %p86, %p87
      %p89 = scmp.ne.s32.totalorder %s75, %s76
      %p90 = scmp.eq.s32.totalorder %s21, 1
      %p91 = por %p89, %p90
      %p93 = scmp.ne.s32.totalorder %s76, %s92
      %p94 = scmp.eq.s32.totalorder %s21, 0
      %p95 = por %p93, %p94
      %p96 = scmp.le.s32.totalorder 1, %s15
      %p97 = scmp.lt.s32.totalorder %s15, 3
      %p98 = pnand %p96, %p97
      %p99 = pneg %p98
      // Predicated region
      $region9: #{tpu_custom_call.1} parent=5 // pred_check
        _
      $region10: #{tpu_custom_call.1} parent=5 // pred_check_branch
        %101 = sbr.rel (%p98) target = $region12
      $region11: #{tpu_custom_call.1} parent=5 // pred_region
        %s102 = ssub.s32 %s15, 1
        // Predicated region
        $region13: #{tpu_custom_call.1} parent=11 // pred_check
          %p103 = pneg %p36
        $region14: #{tpu_custom_call.1} parent=11 // pred_check_branch
          %105 = sbr.rel (%p103) target = $region16
        $region15: #{tpu_custom_call.1} parent=11 // pred_region
          _
        $region16: #{tpu_custom_call.1} parent=11 // pred_fallthru
          _
      $region12: #{tpu_custom_call.1} parent=5 // pred_fallthru
        _
      %p106 = scmp.lt.s32.totalorder %s15, 2
      // Predicated region
      $region17: #{tpu_custom_call.1} parent=5 // pred_check
        %p107 = pneg %p106
      $region18: #{tpu_custom_call.1} parent=5 // pred_check_branch
        %109 = sbr.rel (%p107) target = $region20
      $region19: #{tpu_custom_call.1} parent=5 // pred_region
        // Predicated region
        $region21: #{tpu_custom_call.1} parent=19 // pred_check
          %p110 = pneg %p56
        $region22: #{tpu_custom_call.1} parent=19 // pred_check_branch
          %112 = sbr.rel (%p110) target = $region24
        $region23: #{tpu_custom_call.1} parent=19 // pred_region
          %s113 = sand.u32 %s46, 1
          %s114 = scalar_lea.sflag [#allocation4], %s113
          %s115 = sand.u32 %s46, 1
          %s116 = smul.addr %s115, 8
          %s117 = scalar_lea.vmem [#allocation3], %s116
          %s119 = ssub.s32 128, 128
          %120 = vsyncadd %s114, %s119
          %s121 = smul.addr %s15, 2
          %s122 = smul.addr %s121, 64
          %s123 = scalar_lea.hbm %s1, %s122
          %s125 = sshll.u32 %s117, 4
          %s126 = int_to_ptr.vmem [resolvable:$true] %s125
          %128 = dma.hbm_to_vmem [thread:$0]  %s123, 128, %s126, %s114
        $region24: #{tpu_custom_call.1} parent=19 // pred_fallthru
          _
      $region20: #{tpu_custom_call.1} parent=5 // pred_fallthru
        _
      %p129 = scmp.le.s32.totalorder 1, %s15
      %p130 = scmp.lt.s32.totalorder %s15, 3
      %p131 = pnand %p129, %p130
      %p132 = pneg %p131
      // Predicated region
      $region25: #{tpu_custom_call.1} parent=5 // pred_check
        _
      $region26: #{tpu_custom_call.1} parent=5 // pred_check_branch
        %134 = sbr.rel (%p131) target = $region28
      $region27: #{tpu_custom_call.1} parent=5 // pred_region
        %s135 = ssub.s32 %s15, 1
        %s136 = sand.u32 %s49, 1
        %s137 = scalar_lea.sflag [#allocation4], %s136
        %s138 = sand.u32 %s49, 1
        %s139 = smul.addr %s138, 8
        %s140 = scalar_lea.vmem [#allocation3], %s139
        // Predicated region
        $region29: #{tpu_custom_call.1} parent=27 // pred_check
          %p141 = pneg %p62
        $region30: #{tpu_custom_call.1} parent=27 // pred_check_branch
          %143 = sbr.rel (%p141) target = $region32
        $region31: #{tpu_custom_call.1} parent=27 // pred_region
          %144 = dma.done %s137, 128
        $region32: #{tpu_custom_call.1} parent=27 // pred_fallthru
          _
        %p145 = pneg %p36
        %p146 = pneg %p33
        %s147 = sand.u32 %s49, 1
        %s148 = scalar_lea.sflag [#allocation4], %s147
        %s149 = sand.u32 %s49, 1
        %s150 = smul.addr %s149, 8
        %s151 = scalar_lea.vmem [#allocation3], %s150
        %p152 = pneg %p62
        %p153 = pneg %p59
        %p154 = pneg %p88
        %p155 = pneg %p85
        %s156 = sand.u32 %s75, 1
        %s157 = scalar_lea.sflag [#allocation5], %s156
        %s158 = sand.u32 %s75, 1
        %s159 = smul.addr %s158, 2
        %s160 = scalar_lea.vmem [#allocation6], %s159
        %s161 = sld [smem:[#allocation2]]
        %v162 = vld [vmem:[%s140] sm:$0xff]
        %v163 = vstv %s161
        %v164 = vmul.f32 %v162, %v163
        %v165 = vsub.f32 0.0, %v164
        %v166 = vlog2.pop %v164
        %v167 = vmul.f32 %v166, 0.6931472
        %v168 = vmul.f32 %v165, %v167
        %v170 = vcombine.high %v168, %v168
        %vm172 = vcmask 1043456
        %v173 = vsel %vm172, %v168, 0.0
        %v174 = vsel %vm172, %v170, 0.0
        %v175 = vadd.f32 %v173, %v174
        %176 = vadd.xlane.f32.xlu0 %v175
        %v177 = vpop.xlane.xlu0 %176
        %vm178 = vcmp.lt.s32.totalorder %v168, 0
        %vm179 = vcmp.lt.s32.totalorder %v170, 0
        %v180 = vxor.u32 %v168, 2147483647
        %v181 = vxor.u32 %v170, 2147483647
        %v182 = vsel %vm178, %v180, %v168
        %v183 = vsel %vm179, %v181, %v170
        loop: start=0, step=1, limit=32
        $region33: #{tpu_custom_call.1} parent=27 // loop_pre_header
          _
        $region34: #{tpu_custom_call.1} parent=27 // loop_header
          %s185 = sphi 0, %s189
          %p186 = scmp.ge.s32.totalorder %s185, 32
          %v190 = vphi 2147483648, %v218
          %v191 = vphi 2147483647, %v219
        $region35: #{tpu_custom_call.1} parent=27 // loop_header_branch
          %188 = sbr.rel (%p186) target = $region39
        $region36: #{tpu_custom_call.1} parent=27 // loop_body
          %v192 = vshra.s32 %v190, 1
          %v193 = vshra.s32 %v191, 1
          %v194 = vadd.s32 %v192, %v193
          %v195 = vand.u32 %v190, %v191
          %v196 = vand.u32 %v195, 1
          %v197 = vadd.s32 %v194, %v196
          %vm198 = vcmp.ge.s32.totalorder %v182, %v197
          %vm199 = vcmp.ge.s32.totalorder %v183, %v197
          %v200 = vsel %vm198, 1, 0
          %v201 = vsel %vm199, 1, 0
          %v202 = vsel %vm172, %v200, 0
          %v203 = vsel %vm172, %v201, 0
          %v204 = vadd.s32 %v202, %v203
          %v205 = vand.u32 %v204, 65535
          %v206 = vshrl.u32 %v204, 16
          %v207 = vcvt.s32.f32 %v205
          %v208 = vcvt.s32.f32 %v206
          %209 = vadd.xlane.f32.xlu0 %v207
          %v210 = vpop.xlane.xlu0 %209
          %211 = vadd.xlane.f32.xlu0 %v208
          %v212 = vpop.xlane.xlu0 %211
          %v213 = vcvt.f32.s32 %v210
          %v214 = vcvt.f32.s32 %v212
          %v215 = vshll.u32 %v214, 16
          %v216 = vadd.s32 %v215, %v213
          %vm217 = vcmp.ge.s32.totalorder %v216, 128
          %v218 = vsel %vm217, %v197, %v190
          %v219 = vsel %vm217, %v191, %v197
        $region37: #{tpu_custom_call.1} parent=27 // loop_footer
          %s189 = sadd.s32 1, %s185
        $region38: #{tpu_custom_call.1} parent=27 // loop_footer_branch
          %184 = sbr.rel target = $region34
        $region39: #{tpu_custom_call.1} parent=27 // loop_exit
          _
        %vm220 = vcmp.lt.s32.totalorder %v190, 0
        %v221 = vxor.u32 %v190, 2147483647
        %v222 = vsel %vm220, %v221, %v190
        %vm224 = vcmp.gt.s32.totalorder %v182, %v190
        %vm225 = vcmp.gt.s32.totalorder %v183, %v190
        %v226 = vsel %vm224, 1, 0
        %v227 = vsel %vm225, 1, 0
        %v228 = vsel %vm172, %v226, 0
        %v229 = vsel %vm172, %v227, 0
        %v230 = vadd.s32 %v228, %v229
        %v231 = vand.u32 %v230, 65535
        %v232 = vshrl.u32 %v230, 16
        %v233 = vcvt.s32.f32 %v231
        %v234 = vcvt.s32.f32 %v232
        %235 = vadd.xlane.f32.xlu0 %v233
        %v236 = vpop.xlane.xlu0 %235
        %237 = vadd.xlane.f32.xlu0 %v234
        %v238 = vpop.xlane.xlu0 %237
        %v239 = vcvt.f32.s32 %v236
        %v240 = vcvt.f32.s32 %v238
        %v241 = vshll.u32 %v240, 16
        %v242 = vadd.s32 %v241, %v239
        %v243 = vsel %vm224, %v168, 0.0
        %v244 = vsel %vm225, %v170, 0.0
        %v245 = vsel %vm172, %v243, 0.0
        %v246 = vsel %vm172, %v244, 0.0
        %v247 = vadd.f32 %v245, %v246
        %248 = vadd.xlane.f32.xlu0 %v247
        %v249 = vpop.xlane.xlu0 %248
        %v250 = vcvt.s32.f32 %v242
        %v251 = vsub.f32 128.0, %v250
        %v252 = vmul.f32 %v251, %v222
        %v253 = vadd.f32 %v249, %v252
        %vm254 = vcmask 1041408
        %v255 = vsel %vm254, %v177, 0.0
        %v256 = vrot.slane %v255, 4
        %v257 = vadd.f32 %v255, %v256
        %v258 = vrot.slane %v257, 2
        %v259 = vadd.f32 %v257, %v258
        %v260 = vrot.slane %v259, 1
        %v261 = vadd.f32 %v259, %v260
        %v262 = vsel %vm254, %v253, 0.0
        %v263 = vrot.slane %v262, 4
        %v264 = vadd.f32 %v262, %v263
        %v265 = vrot.slane %v264, 2
        %v266 = vadd.f32 %v264, %v265
        %v267 = vrot.slane %v266, 1
        %v268 = vadd.f32 %v266, %v267
        %v269 = vmul.f32 %v261, 0.001953125
        %v270 = vmul.f32 %v268, 0.00390625
        %v271 = vsub.f32 %v270, %v269
        %v272 = vmul.f32 %v271, 2.0
        %273 = vst [vmem:[%s160] sm:$0x1] %v272
        %v275 = vrot.slane %v177, 2
        %v277 = vsel %vm254, %v275, 0.0
        %v278 = vrot.slane %v277, 4
        %v279 = vadd.f32 %v277, %v278
        %v280 = vrot.slane %v279, 2
        %v281 = vadd.f32 %v279, %v280
        %v282 = vrot.slane %v281, 1
        %v283 = vadd.f32 %v281, %v282
        %v285 = vrot.slane %v253, 2
        %v287 = vsel %vm254, %v285, 0.0
        %v288 = vrot.slane %v287, 4
        %v289 = vadd.f32 %v287, %v288
        %v290 = vrot.slane %v289, 2
        %v291 = vadd.f32 %v289, %v290
        %v292 = vrot.slane %v291, 1
        %v293 = vadd.f32 %v291, %v292
        %v294 = vmul.f32 %v283, 0.001953125
        %v295 = vmul.f32 %v293, 0.00390625
        %v296 = vsub.f32 %v295, %v294
        %v297 = vmul.f32 %v296, 2.0
        %298 = vst [vmem:[%s160 + $0x1] sm:$0x1] %v297
        %s299 = sand.u32 %s75, 1
        %s300 = scalar_lea.sflag [#allocation5], %s299
        %s301 = sand.u32 %s75, 1
        %s302 = smul.addr %s301, 2
        %s303 = scalar_lea.vmem [#allocation6], %s302
        // Predicated region
        $region40: #{tpu_custom_call.1} parent=27 // pred_check
          %p304 = pneg %p85
        $region41: #{tpu_custom_call.1} parent=27 // pred_check_branch
          %306 = sbr.rel (%p304) target = $region43
        $region42: #{tpu_custom_call.1} parent=27 // pred_region
          %s308 = ssub.s32 32, 32
          %309 = vsyncadd %s300, %s308
          %s310 = smul.addr %s20, 32
          %s311 = scalar_lea.hbm %s2, %s310
          %s313 = sshll.u32 %s303, 4
          %s314 = int_to_ptr.vmem [resolvable:$true] %s313
          %316 = dma.vmem_to_hbm [thread:$0]  %s314, 32, %s311, %s300
        $region43: #{tpu_custom_call.1} parent=27 // pred_fallthru
          _
      $region28: #{tpu_custom_call.1} parent=5 // pred_fallthru
        _
      %p317 = scmp.le.s32.totalorder 2, %s15
      // Predicated region
      $region44: #{tpu_custom_call.1} parent=5 // pred_check
        %p318 = pneg %p317
      $region45: #{tpu_custom_call.1} parent=5 // pred_check_branch
        %320 = sbr.rel (%p318) target = $region47
      $region46: #{tpu_custom_call.1} parent=5 // pred_region
        %s321 = ssub.s32 %s15, 2
        // Predicated region
        $region48: #{tpu_custom_call.1} parent=46 // pred_check
          %p322 = pneg %p91
        $region49: #{tpu_custom_call.1} parent=46 // pred_check_branch
          %324 = sbr.rel (%p322) target = $region51
        $region50: #{tpu_custom_call.1} parent=46 // pred_region
          %s325 = sand.u32 %s76, 1
          %s326 = scalar_lea.sflag [#allocation5], %s325
          %s327 = sand.u32 %s76, 1
          %s328 = smul.addr %s327, 2
          %s329 = scalar_lea.vmem [#allocation6], %s328
          %330 = dma.done %s326, 32
        $region51: #{tpu_custom_call.1} parent=46 // pred_fallthru
          _
      $region47: #{tpu_custom_call.1} parent=5 // pred_fallthru
        _
    $region6: #{tpu_custom_call.1} parent=1 // loop_footer
      %s19 = sadd.s32 1, %s15
    $region7: #{tpu_custom_call.1} parent=1 // loop_footer_branch
      %14 = sbr.rel target = $region3
    $region8: #{tpu_custom_call.1} parent=1 // loop_exit
      _
    %331 = vsyncpa [#allocation4], 1
    %s332 = scalar_lea.sflag [#allocation4], 1
    %333 = vsyncpa %s332, 1
    %334 = vsyncpa [#allocation5], 1
    %s335 = scalar_lea.sflag [#allocation5], 1
    %336 = vsyncpa %s335, 1

</llo_original>
